<compile_context>
chip_gen: v7x
topology: tpu7x:2x2x1
jax: 0.10.0
libtpu: 0.0.40
codegen_flags: <defaults>
</compile_context>

<pallas_src>
import numpy as np
import jax
import jax.numpy as jnp
from jax.experimental import pallas as pl
from jax.experimental.pallas import tpu as pltpu


def _silu(v):
    return v * jax.nn.sigmoid(v)


def _round_up(n, m):
    return ((n + m - 1) // m) * m


def _pad2(a, rows, cols):
    a = a.astype(jnp.float32)
    return jnp.pad(a, ((0, rows - a.shape[0]), (0, cols - a.shape[1])))


def _vmem_limit(block_bytes):
    # Double-buffered blocks + headroom; tight enough for v7x's 64 MiB VMEM.
    return int(min(max(2 * block_bytes + (4 << 20), 16 << 20), 48 << 20))


# ----------------------- stage 1: per-edge input linears -----------------------

def _make_edge_in_kernel(hp, cdt):
    def kernel(x_ref, rbf_ref, wjk_ref, bjk_ref, wrbf_ref, wdown_ref,
               xji_out, xdown_out):
        xb = x_ref[...].astype(cdt)
        # Fused lin_ji | lin_kj: one (ET, HP) x (HP, 2*HP) matmul.
        y = _silu(jnp.dot(xb, wjk_ref[...].astype(cdt),
                          preferred_element_type=jnp.float32) + bjk_ref[...])
        x_ji = y[:, :hp]                      # 128-aligned lane slice (free)
        x_kj = y[:, hp:]
        r = jnp.dot(rbf_ref[...].astype(cdt), wrbf_ref[...].astype(cdt),
                    preferred_element_type=jnp.float32)
        x_kj = x_kj * r
        xdown_out[...] = _silu(jnp.dot(x_kj.astype(cdt), wdown_ref[...].astype(cdt),
                                       preferred_element_type=jnp.float32))
        xji_out[...] = x_ji
    return kernel


# -------- fused stage 2+3: banded (sorted) per-triplet transform + scatter --------

def _make_band_scatter_kernel(edge_tile, cdt):
    def kernel(bs_ref, nb_ref, sbf_ref, gath_ref, ji_ref, wsbf_ref, agg_ref):
        e = pl.program_id(0)
        b = pl.program_id(1)

        @pl.when(b == 0)
        def _init():
            agg_ref[...] = jnp.zeros_like(agg_ref)

        @pl.when(b < nb_ref[e])
        def _work():
            s = jnp.dot(sbf_ref[...].astype(cdt), wsbf_ref[...].astype(cdt),
                        preferred_element_type=jnp.float32)       # [TT, IP]
            d = gath_ref[...] * s                                  # [TT, IP]
            trip_tile = d.shape[0]
            row0 = e * edge_tile
            e_iota = jax.lax.broadcasted_iota(
                jnp.int32, (edge_tile, trip_tile), 0) + row0
            onehot = (e_iota == ji_ref[...]).astype(cdt)           # [ET, TT]
            agg_ref[...] += jnp.dot(onehot, d.astype(cdt),
                                    preferred_element_type=jnp.float32)
    return kernel


# ----------------------- stage 4: lin_up + residual stack -----------------------

def _make_edge_out_kernel(num_before_skip, num_after_skip, cdt):
    def kernel(*refs):
        x_ref, xji_ref, agg_ref, wup_ref = refs[:4]
        pos = 4
        res_before = [refs[pos + 4 * i: pos + 4 * i + 4] for i in range(num_before_skip)]
        pos += 4 * num_before_skip
        wlin_ref, blin_ref = refs[pos], refs[pos + 1]
        pos += 2
        res_after = [refs[pos + 4 * i: pos + 4 * i + 4] for i in range(num_after_skip)]
        pos += 4 * num_after_skip
        out_ref = refs[pos]

        def lin(v, w, b=None):
            y = jnp.dot(v.astype(cdt), w[...].astype(cdt),
                        preferred_element_type=jnp.float32)
            return y + b[...] if b is not None else y

        h = xji_ref[...] + _silu(lin(agg_ref[...], wup_ref))
        for (w1, b1, w2, b2) in res_before:
            h = h + _silu(lin(_silu(lin(h, w1, b1)), w2, b2))
        h = _silu(lin(h, wlin_ref, blin_ref)) + x_ref[...]
        for (w1, b1, w2, b2) in res_after:
            h = h + _silu(lin(_silu(lin(h, w1, b1)), w2, b2))
        out_ref[...] = h.astype(out_ref.dtype)
    return kernel


# ----------------------------- wrapper -----------------------------

def interaction_pp_block(x, rbf, sbf, idx_kj, idx_ji, params,
                         num_before_skip, num_after_skip,
                         *, edge_tile=512, trip_tile=512,
                         compute_dtype=jnp.float32):
    E, H = x.shape
    T, NSNR = sbf.shape
    NR = rbf.shape[1]

    it = iter(params)
    w_rbf1, w_rbf2, w_sbf1, w_sbf2 = next(it), next(it), next(it), next(it)
    w_kj, b_kj, w_ji, b_ji, w_down, w_up = (next(it) for _ in range(6))
    res_before = [tuple(next(it) for _ in range(4)) for _ in range(num_before_skip)]
    w_lin, b_lin = next(it), next(it)
    res_after = [tuple(next(it) for _ in range(4)) for _ in range(num_after_skip)]
    I = w_down.shape[1]

    HP = _round_up(H, 128)
    IP = _round_up(I, 128)

    # Row tiling: edge tiles multiple of 8 (sublane dim); triplet tiles multiple
    # of 128 unless they cover the whole padded axis (lane-dense ji blocks).
    EP0 = _round_up(E, 8)
    if EP0 <= edge_tile:
        ET = _round_up(-(-EP0 // 2), 8) if EP0 >= 16 else EP0   # >=2 tiles (v7x 2 TCs)
    else:
        ET = _round_up(edge_tile, 8)
    EP = _round_up(E, ET)
    TP0 = _round_up(T, 8)
    TT = TP0 if TP0 <= trip_tile else _round_up(trip_tile, 128)
    TP = _round_up(T, TT)
    n_e = EP // ET
    f32 = jnp.float32
    cdt = compute_dtype

    # ---- sort triplets by idx_ji (host) and build per-edge-tile band table ----
    ji_np = np.asarray(jax.device_get(idx_ji)).astype(np.int64).reshape(-1)
    order_np = np.argsort(ji_np, kind="stable")
    ji_sorted_np = ji_np[order_np]
    edges0 = np.arange(n_e, dtype=np.int64) * ET
    t_lo = np.searchsorted(ji_sorted_np, edges0, side="left")
    t_hi = np.searchsorted(ji_sorted_np, edges0 + ET, side="left")
    nonempty = t_hi > t_lo
    blk_lo = np.where(nonempty, t_lo // TT, 0)
    blk_hi = np.where(nonempty, (t_hi - 1) // TT + 1, 0)
    n_blk_np = (blk_hi - blk_lo).astype(np.int32)
    b_start_np = blk_lo.astype(np.int32)
    max_b = max(1, int(n_blk_np.max())) if n_blk_np.size else 1

    b_start = jnp.asarray(b_start_np, jnp.int32)
    n_blk = jnp.asarray(n_blk_np, jnp.int32)
    order = jnp.asarray(order_np, jnp.int32)

    # ---- pad / permute device arrays ----
    x_p = _pad2(x, EP, HP)
    rbf_p = _pad2(rbf, EP, NR)
    sbf_p = _pad2(jnp.take(sbf.astype(f32), order, axis=0), TP, NSNR)
    kj_p = jnp.pad(jnp.take(idx_kj.astype(jnp.int32).reshape(-1), order),
                   (0, TP - T))
    ji_p = jnp.pad(jnp.asarray(ji_sorted_np, jnp.int32), (0, TP - T),
                   constant_values=2 ** 30).reshape(1, TP)   # sentinel never matches

    # Fold the basis_emb bottleneck once (tiny matmuls, plain XLA).
    W_rbf = _pad2(w_rbf1.astype(f32) @ w_rbf2.astype(f32), NR, HP)       # [NR, HP]
    W_sbf = _pad2(w_sbf1.astype(f32) @ w_sbf2.astype(f32), NSNR, IP)     # [NS*NR, IP]

    # Fused ji|kj weight (single N=2*HP matmul in stage 1).
    w_jk = jnp.concatenate([_pad2(w_ji, HP, HP), _pad2(w_kj, HP, HP)], axis=1)
    b_jk = jnp.concatenate([_pad2(b_ji, 1, HP), _pad2(b_kj, 1, HP)], axis=1)
    w_down_p = _pad2(w_down, HP, IP)
    w_up_p = _pad2(w_up, IP, HP)
    w_lin_p, b_lin_p = _pad2(w_lin, HP, HP), _pad2(b_lin, 1, HP)

    def pad_res(blk):
        w1, b1, w2, b2 = blk
        return (_pad2(w1, HP, HP), _pad2(b1, 1, HP), _pad2(w2, HP, HP), _pad2(b2, 1, HP))
    rb_p = [pad_res(b) for b in res_before]
    ra_p = [pad_res(b) for b in res_after]

    row_e = lambda cols: pl.BlockSpec((ET, cols), lambda i: (i, 0))
    const1 = lambda shape: pl.BlockSpec(shape, lambda i: (0, 0))    # resident weights

    # ---- stage 1: per-edge input linears (E tiles, parallel) ----
    st1_blocks = 4 * (ET * (2 * HP + NR + IP)
                      + HP * 2 * HP + 2 * HP + NR * HP + HP * IP)
    x_ji_p, x_down_p = pl.pallas_call(
        _make_edge_in_kernel(HP, cdt),
        out_shape=(jax.ShapeDtypeStruct((EP, HP), f32),
                   jax.ShapeDtypeStruct((EP, IP), f32)),
        grid=(n_e,),
        in_specs=[row_e(HP), row_e(NR),
                  const1((HP, 2 * HP)), const1((1, 2 * HP)),
                  const1((NR, HP)), const1((HP, IP))],
        out_specs=(row_e(HP), row_e(IP)),
        compiler_params=pltpu.CompilerParams(
            dimension_semantics=("parallel",),
            vmem_limit_bytes=_vmem_limit(st1_blocks)),
        cost_estimate=pl.CostEstimate(
            flops=2 * EP * HP * (2 * HP + NR + IP),
            transcendentals=EP * (2 * HP + IP),
            bytes_accessed=4 * EP * (3 * HP + NR + IP)),
    )(x_p, rbf_p, w_jk, b_jk, W_rbf, w_down_p)

    # ---- row gather x_down[idx_kj] (sorted order), plain XLA ----
    # TODO(synk): fold into the banded scatter kernel as an in-kernel DMA gather.
    gathered = jnp.take(x_down_p, kj_p, axis=0)                     # [TP, IP]

    # ---- fused stage 2+3: banded segment-sum scatter (sorted triplets) ----
    def band_idx(e, b, bs, nb):
        # Clamp out-of-band steps to the last in-band block: same block index
        # as the previous step -> Pallas skips the DMA; pl.when skips compute.
        return bs[e] + jnp.minimum(b, jnp.maximum(nb[e] - 1, 0))

    scatter_blocks = 4 * (TT * (NSNR + IP) + TT + NSNR * IP + ET * IP)
    agg = pl.pallas_call(
        _make_band_scatter_kernel(ET, cdt),
        out_shape=jax.ShapeDtypeStruct((EP, IP), f32),
        grid_spec=pltpu.PrefetchScalarGridSpec(
            num_scalar_prefetch=2,
            grid=(n_e, max_b),
            in_specs=[
                pl.BlockSpec((TT, NSNR),
                             lambda e, b, bs, nb: (band_idx(e, b, bs, nb), 0)),
                pl.BlockSpec((TT, IP),
                             lambda e, b, bs, nb: (band_idx(e, b, bs, nb), 0)),
                pl.BlockSpec((1, TT),
                             lambda e, b, bs, nb: (0, band_idx(e, b, bs, nb))),
                pl.BlockSpec((NSNR, IP), lambda e, b, bs, nb: (0, 0)),
            ],
            out_specs=pl.BlockSpec((ET, IP), lambda e, b, bs, nb: (e, 0)),
        ),
        compiler_params=pltpu.CompilerParams(
            dimension_semantics=("parallel", "arbitrary"),
            vmem_limit_bytes=_vmem_limit(scatter_blocks)),
        cost_estimate=pl.CostEstimate(
            flops=2 * TP * IP * (NSNR + ET),
            transcendentals=0,
            bytes_accessed=4 * (TP * (NSNR + IP + 1) + EP * IP)),
    )(b_start, n_blk, sbf_p, gathered, ji_p, W_sbf)

    # ---- stage 4: lin_up + residual stack + skip (E tiles, parallel) ----
    st4_inputs = [x_p, x_ji_p, agg, w_up_p]
    st4_specs = [row_e(HP), row_e(HP), row_e(IP), const1((IP, HP))]
    for blk in rb_p:
        st4_inputs += list(blk)
        st4_specs += [const1((HP, HP)), const1((1, HP)), const1((HP, HP)), const1((1, HP))]
    st4_inputs += [w_lin_p, b_lin_p]
    st4_specs += [const1((HP, HP)), const1((1, HP))]
    for blk in ra_p:
        st4_inputs += list(blk)
        st4_specs += [const1((HP, HP)), const1((1, HP)), const1((HP, HP)), const1((1, HP))]

    n_res = num_before_skip + num_after_skip
    st4_blocks = 4 * (ET * (3 * HP + IP)
                      + (2 * n_res + 1) * (HP * HP + HP) + IP * HP)
    out_p = pl.pallas_call(
        _make_edge_out_kernel(num_before_skip, num_after_skip, cdt),
        out_shape=jax.ShapeDtypeStruct((EP, HP), f32),
        grid=(n_e,),
        in_specs=st4_specs,
        out_specs=row_e(HP),
        compiler_params=pltpu.CompilerParams(
            dimension_semantics=("parallel",),
            vmem_limit_bytes=_vmem_limit(st4_blocks)),
        cost_estimate=pl.CostEstimate(
            flops=2 * EP * HP * (IP + (2 * n_res + 1) * HP),
            transcendentals=EP * HP * (2 * n_res + 2),
            bytes_accessed=4 * EP * (4 * HP + IP)),
    )(*st4_inputs)

    return out_p[:E, :H].astype(x.dtype)


# ----------------------------- pure-JAX reference -----------------------------

def reference(x, rbf, sbf, idx_kj, idx_ji, params,
              num_before_skip, num_after_skip):
    """Pure-JAX reference mirroring the PyTorch forward exactly."""
    it = iter(params)
    w_rbf1, w_rbf2, w_sbf1, w_sbf2 = next(it), next(it), next(it), next(it)
    w_kj, b_kj, w_ji, b_ji, w_down, w_up = (next(it) for _ in range(6))
    res_before = [(next(it), next(it), next(it), next(it))
                  for _ in range(num_before_skip)]
    w_lin, b_lin = next(it), next(it)
    res_after = [(next(it), next(it), next(it), next(it))
                 for _ in range(num_after_skip)]

    def lin(v, w, b=None):
        y = v @ w
        return y + b if b is not None else y

    x_ji = _silu(lin(x, w_ji, b_ji))
    x_kj = _silu(lin(x, w_kj, b_kj))
    r = lin(lin(rbf, w_rbf1), w_rbf2)
    x_kj = x_kj * r
    x_kj = _silu(lin(x_kj, w_down))
    s = lin(lin(sbf, w_sbf1), w_sbf2)
    x_kj = x_kj[idx_kj] * s
    x_kj = jnp.zeros((x.shape[0], x_kj.shape[1]), x_kj.dtype).at[idx_ji].add(x_kj)
    x_kj = _silu(lin(x_kj, w_up))
    h = x_ji + x_kj
    for (w1, b1, w2, b2) in res_before:
        h = h + _silu(lin(_silu(lin(h, w1, b1)), w2, b2))
    h = _silu(lin(h, w_lin, b_lin)) + x
    for (w1, b1, w2, b2) in res_after:
        h = h + _silu(lin(_silu(lin(h, w1, b1)), w2, b2))
    return h


def build_params(key, H, I, B, NS, NR, num_before_skip, num_after_skip):
    # Deterministic synthetic init.
    # TODO(synk): exact glorot_orthogonal init omitted — values are synthetic but deterministic.
    params = []
    scale = 0.1

    def w(k, shape):
        return (scale * jax.random.normal(k, shape)).astype(jnp.float32)

    keys = iter(jax.random.split(key, 64))
    params.append(w(next(keys), (NR, B)))          # lin_rbf1 (no bias)
    params.append(w(next(keys), (B, H)))           # lin_rbf2 (no bias)
    params.append(w(next(keys), (NS * NR, B)))     # lin_sbf1 (no bias)
    params.append(w(next(keys), (B, I)))           # lin_sbf2 (no bias)
    params.append(w(next(keys), (H, H)))           # lin_kj
    params.append(jnp.zeros((1, H), jnp.float32))  # lin_kj bias
    params.append(w(next(keys), (H, H)))           # lin_ji
    params.append(jnp.zeros((1, H), jnp.float32))  # lin_ji bias
    params.append(w(next(keys), (H, I)))           # lin_down (no bias)
    params.append(w(next(keys), (I, H)))           # lin_up (no bias)
    for _ in range(num_before_skip):
        params.append(w(next(keys), (H, H)))
        params.append(jnp.zeros((1, H), jnp.float32))
        params.append(w(next(keys), (H, H)))
        params.append(jnp.zeros((1, H), jnp.float32))
    params.append(w(next(keys), (H, H)))           # lin
    params.append(jnp.zeros((1, H), jnp.float32))  # lin bias
    for _ in range(num_after_skip):
        params.append(w(next(keys), (H, H)))
        params.append(jnp.zeros((1, H), jnp.float32))
        params.append(w(next(keys), (H, H)))
        params.append(jnp.zeros((1, H), jnp.float32))
    return params


if __name__ == "__main__":
    # Small, module-consistent shapes.
    H = 32            # hidden_channels
    I = 16            # int_emb_size
    B = 8             # basis_emb_size
    NS, NR = 4, 8     # num_spherical, num_radial
    E = 64            # number of edges (rows of x / rbf)
    T = 96            # number of triplets (rows of sbf / idx arrays)
    num_before_skip = 1
    num_after_skip = 2

    key = jax.random.PRNGKey(0)
    k_x, k_rbf, k_sbf, k_kj, k_ji, k_p = jax.random.split(key, 6)

    x = jax.random.normal(k_x, (E, H), jnp.float32)
    rbf = jax.random.normal(k_rbf, (E, NR), jnp.float32)
    sbf = jax.random.normal(k_sbf, (T, NS * NR), jnp.float32)
    idx_kj = jax.random.randint(k_kj, (T,), 0, E, jnp.int32)
    idx_ji = jax.random.randint(k_ji, (T,), 0, E, jnp.int32)

    params = build_params(k_p, H, I, B, NS, NR, num_before_skip, num_after_skip)

    out = interaction_pp_block(x, rbf, sbf, idx_kj, idx_ji, params,
                               num_before_skip, num_after_skip)
    out = jax.block_until_ready(out)

    ref = reference(x, rbf, sbf, idx_kj, idx_ji, params,
                    num_before_skip, num_after_skip)
    assert out.shape == (E, H) and out.dtype == jnp.float32
    assert jnp.allclose(out, ref, atol=2e-4, rtol=2e-4), "mismatch vs JAX reference"

    print("KERNEL_OK")
</pallas_src>

<mosaic_0001>
module attributes {stable_mosaic.version = 11 : i64} {
  func.func @kernel(%arg0: i32, %arg1: memref<32x128xf32, #tpu.memory_space<vmem>>, %arg2: memref<32x8xf32, #tpu.memory_space<vmem>>, %arg3: memref<128x256xf32, #tpu.memory_space<vmem>>, %arg4: memref<1x256xf32, #tpu.memory_space<vmem>>, %arg5: memref<8x128xf32, #tpu.memory_space<vmem>>, %arg6: memref<128x128xf32, #tpu.memory_space<vmem>>, %arg7: memref<32x128xf32, #tpu.memory_space<vmem>>, %arg8: memref<32x128xf32, #tpu.memory_space<vmem>>) attributes {dimension_semantics = [#tpu.dimension_semantics<parallel>], iteration_bounds = array<i64: 2>, scalar_prefetch = 0 : i64, scratch_operands = 0 : i64, tpu.core_type = #tpu.core_type<tc>, window_params = [{transform_indices = @transform_0, window_bounds = array<i64: 32, 128>}, {transform_indices = @transform_1, window_bounds = array<i64: 32, 8>}, {pipeline_mode = #tpu.pipeline_mode<synchronous>, transform_indices = @transform_2, window_bounds = array<i64: 128, 256>}, {pipeline_mode = #tpu.pipeline_mode<synchronous>, transform_indices = @transform_3, window_bounds = array<i64: 1, 256>}, {pipeline_mode = #tpu.pipeline_mode<synchronous>, transform_indices = @transform_4, window_bounds = array<i64: 8, 128>}, {pipeline_mode = #tpu.pipeline_mode<synchronous>, transform_indices = @transform_5, window_bounds = array<i64: 128, 128>}, {transform_indices = @transform_6, window_bounds = array<i64: 32, 128>}, {transform_indices = @transform_7, window_bounds = array<i64: 32, 128>}]} {
    %c0 = arith.constant 0 : index
    %c0_0 = arith.constant 0 : index
    %0 = vector.load %arg1[%c0, %c0_0] : memref<32x128xf32, #tpu.memory_space<vmem>>, vector<32x128xf32>
    %c0_1 = arith.constant 0 : index
    %c0_2 = arith.constant 0 : index
    %1 = vector.load %arg3[%c0_1, %c0_2] : memref<128x256xf32, #tpu.memory_space<vmem>>, vector<128x256xf32>
    %cst = arith.constant dense<0.000000e+00> : vector<32x256xf32>
    %2 = tpu.matmul %0, %1, %cst {dimension_numbers = #tpu.dot_dimension_numbers<[1], [0], [0], [1], [0, 0, 1, 1], [], []>} : vector<32x128xf32>, vector<128x256xf32>, vector<32x256xf32> -> vector<32x256xf32>
    %c0_3 = arith.constant 0 : index
    %c0_4 = arith.constant 0 : index
    %3 = vector.load %arg4[%c0_3, %c0_4] : memref<1x256xf32, #tpu.memory_space<vmem>>, vector<1x256xf32>
    %4 = vector.broadcast %3 : vector<1x256xf32> to vector<32x256xf32>
    %5 = arith.addf %2, %4 : vector<32x256xf32>
    %6 = arith.negf %5 : vector<32x256xf32>
    %7 = math.exp %6 : vector<32x256xf32>
    %cst_5 = arith.constant 1.000000e+00 : f32
    %8 = vector.broadcast %cst_5 : f32 to vector<32x256xf32>
    %9 = arith.addf %8, %7 : vector<32x256xf32>
    %10 = arith.divf %8, %9 : vector<32x256xf32>
    %11 = arith.mulf %5, %10 : vector<32x256xf32>
    %12 = vector.extract_strided_slice %11 {offsets = [0, 0], sizes = [32, 128], strides = [1, 1]} : vector<32x256xf32> to vector<32x128xf32>
    %13 = vector.extract_strided_slice %11 {offsets = [0, 128], sizes = [32, 128], strides = [1, 1]} : vector<32x256xf32> to vector<32x128xf32>
    %c0_6 = arith.constant 0 : index
    %c0_7 = arith.constant 0 : index
    %14 = vector.load %arg2[%c0_6, %c0_7] : memref<32x8xf32, #tpu.memory_space<vmem>>, vector<32x8xf32>
    %c0_8 = arith.constant 0 : index
    %c0_9 = arith.constant 0 : index
    %15 = vector.load %arg5[%c0_8, %c0_9] : memref<8x128xf32, #tpu.memory_space<vmem>>, vector<8x128xf32>
    %cst_10 = arith.constant dense<0.000000e+00> : vector<32x128xf32>
    %16 = tpu.matmul %14, %15, %cst_10 {dimension_numbers = #tpu.dot_dimension_numbers<[1], [0], [0], [1], [0, 0, 1, 1], [], []>} : vector<32x8xf32>, vector<8x128xf32>, vector<32x128xf32> -> vector<32x128xf32>
    %17 = arith.mulf %13, %16 : vector<32x128xf32>
    %c0_11 = arith.constant 0 : index
    %c0_12 = arith.constant 0 : index
    %18 = vector.load %arg6[%c0_11, %c0_12] : memref<128x128xf32, #tpu.memory_space<vmem>>, vector<128x128xf32>
    %cst_13 = arith.constant dense<0.000000e+00> : vector<32x128xf32>
    %19 = tpu.matmul %17, %18, %cst_13 {dimension_numbers = #tpu.dot_dimension_numbers<[1], [0], [0], [1], [0, 0, 1, 1], [], []>} : vector<32x128xf32>, vector<128x128xf32>, vector<32x128xf32> -> vector<32x128xf32>
    %20 = arith.negf %19 : vector<32x128xf32>
    %21 = math.exp %20 : vector<32x128xf32>
    %cst_14 = arith.constant 1.000000e+00 : f32
    %22 = vector.broadcast %cst_14 : f32 to vector<32x128xf32>
    %23 = arith.addf %22, %21 : vector<32x128xf32>
    %24 = arith.divf %22, %23 : vector<32x128xf32>
    %25 = arith.mulf %19, %24 : vector<32x128xf32>
    %c0_15 = arith.constant 0 : index
    %c0_16 = arith.constant 0 : index
    %26 = vector.load %arg8[%c0_15, %c0_16] : memref<32x128xf32, #tpu.memory_space<vmem>>, vector<32x128xf32>
    tpu.vector_store %arg8[%c0_15, %c0_16], %25 {strides = array<i32>} : memref<32x128xf32, #tpu.memory_space<vmem>>, vector<32x128xf32>,
    %c0_17 = arith.constant 0 : index
    %c0_18 = arith.constant 0 : index
    %27 = vector.load %arg7[%c0_17, %c0_18] : memref<32x128xf32, #tpu.memory_space<vmem>>, vector<32x128xf32>
    tpu.vector_store %arg7[%c0_17, %c0_18], %12 {strides = array<i32>} : memref<32x128xf32, #tpu.memory_space<vmem>>, vector<32x128xf32>,
    return
  }
  func.func @transform_0(%arg0: i32) -> (i32, i32) {
    %c0_i32 = arith.constant 0 : i32
    %c0_i32_0 = arith.constant 0 : i32
    return %arg0, %c0_i32 : i32, i32
  }
  func.func @transform_1(%arg0: i32) -> (i32, i32) {
    %c0_i32 = arith.constant 0 : i32
    %c0_i32_0 = arith.constant 0 : i32
    return %arg0, %c0_i32 : i32, i32
  }
  func.func @transform_2(%arg0: i32) -> (i32, i32) {
    %c0_i32 = arith.constant 0 : i32
    %c0_i32_0 = arith.constant 0 : i32
    %c0_i32_1 = arith.constant 0 : i32
    return %c0_i32, %c0_i32_0 : i32, i32
  }
  func.func @transform_3(%arg0: i32) -> (i32, i32) {
    %c0_i32 = arith.constant 0 : i32
    %c0_i32_0 = arith.constant 0 : i32
    %c0_i32_1 = arith.constant 0 : i32
    return %c0_i32, %c0_i32_0 : i32, i32
  }
  func.func @transform_4(%arg0: i32) -> (i32, i32) {
    %c0_i32 = arith.constant 0 : i32
    %c0_i32_0 = arith.constant 0 : i32
    %c0_i32_1 = arith.constant 0 : i32
    return %c0_i32, %c0_i32_0 : i32, i32
  }
  func.func @transform_5(%arg0: i32) -> (i32, i32) {
    %c0_i32 = arith.constant 0 : i32
    %c0_i32_0 = arith.constant 0 : i32
    %c0_i32_1 = arith.constant 0 : i32
    return %c0_i32, %c0_i32_0 : i32, i32
  }
  func.func @transform_6(%arg0: i32) -> (i32, i32) {
    %c0_i32 = arith.constant 0 : i32
    %c0_i32_0 = arith.constant 0 : i32
    return %arg0, %c0_i32 : i32, i32
  }
  func.func @transform_7(%arg0: i32) -> (i32, i32) {
    %c0_i32 = arith.constant 0 : i32
    %c0_i32_0 = arith.constant 0 : i32
    return %arg0, %c0_i32 : i32, i32
  }
}

</mosaic_0001>

<llo_original>
// kernel: tpu_custom_call.1
$region0: #{tpu_custom_call.1}
  #allocation0 [shape = 'u32[]', space=smem, size = 0x4, offset = 0x4, fixed_abs, tag = 'smem constant byte address 0x4 - core index']
  #allocation1 [shape = 'u32[144,128]{1,0:T(1,128)}', space=vmem, size = 0x12000, scoped, tag = 'internal scratch']
  %s0 = inlined_call_operand.vmem [shape: f32[64,128], index: 0, kind: input, shape index: {}]
  %s1 = inlined_call_operand.vmem [shape: f32[64,8], index: 1, kind: input, shape index: {}]
  %s2 = inlined_call_operand.hbm [shape: f32[128,256], index: 2, kind: input, shape index: {}]
  %s3 = inlined_call_operand.vmem [shape: f32[1,256], index: 3, kind: input, shape index: {}]
  %s4 = inlined_call_operand.vmem [shape: f32[8,128], index: 4, kind: input, shape index: {}]
  %s5 = inlined_call_operand.hbm [shape: f32[128,128], index: 5, kind: input, shape index: {}]
  %s6 = inlined_call_operand.hbm [shape: f32[64,128], index: 6, kind: output, shape index: {0}]
  %s7 = inlined_call_operand.hbm [shape: f32[64,128], index: 7, kind: output, shape index: {1}]
  %8 = xla_tuple %s6, %s7
  %s9 = sld [smem:[#allocation0]]
  $region73: #{tpu_custom_call.1} parent=0
    _
  %s11 = ssub.s32 1, %s9
  %s12 = scalar_select 0, %s11, %s9
  $region1: #{tpu_custom_call.1} parent=0
    #allocation2 [shape = 'u8[131072]{0}', space=vmem, size = 0x20000, scoped, tag = 'input window, operand 2, single buffered']
    #allocation3 [shape = 's32[2]{0}', space=sflag, size = 0x8, scoped, tag = 'scoped memory for tpu_custom_call.1']
    #allocation4 [shape = 's32[2]{0}', space=sflag, size = 0x8, scoped, tag = 'scoped memory for tpu_custom_call.1']
    #allocation5 [shape = 'u8[65536]{0}', space=vmem, size = 0x10000, scoped, tag = 'input window, operand 5, single buffered']
    #allocation6 [shape = 's32[1]{0}', space=sflag, size = 0x4, scoped, tag = 'scoped memory for tpu_custom_call.1']
    #allocation7 [shape = 'u8[32768]{0}', space=vmem, size = 0x8000, scoped, tag = 'output window, operand 0']
    #allocation8 [shape = 'u8[32768]{0}', space=vmem, size = 0x8000, scoped, tag = 'output window, operand 1']
    #allocation9 [shape = 's32[2]{0}', space=sflag, size = 0x8, scoped, tag = 'scoped memory for tpu_custom_call.1']
    %13 = vsyncpa [#allocation3], 0
    %14 = vsyncpa [#allocation6], 0
    %15 = vsyncpa [#allocation4], 0
    %s16 = scalar_lea.sflag [#allocation4], 1
    %17 = vsyncpa %s16, 0
    %18 = vsyncpa [#allocation9], 0
    %s19 = scalar_lea.sflag [#allocation9], 1
    %20 = vsyncpa %s19, 0
    loop: start=0, step=1, limit=4
    $region2: #{tpu_custom_call.1} parent=1 // loop_pre_header
      _
    $region3: #{tpu_custom_call.1} parent=1 // loop_header
      %s22 = sphi 0, %s26
      %p23 = scmp.ge.s32.totalorder %s22, 4
      %s32 = sphi 0, %s34
      %s35 = sphi 0, %s32
      %s36 = sphi 0, %s35
      %s52 = sphi 0, %s36
      %s58 = sphi 0, %s60
      %s61 = sphi 0, %s58
      %s62 = sphi 0, %s61
      %s78 = sphi 0, %s62
      %s82 = sphi 0, %s82
      %s84 = sphi 0, %s82
      %s85 = sphi 0, %s84
      %s99 = sphi 0, %s85
      %s103 = sphi 0, %s103
      %s105 = sphi 0, %s103
      %s106 = sphi 0, %s105
      %s120 = sphi 0, %s106
      %s124 = sphi 0, %s124
      %s126 = sphi 0, %s124
      %s127 = sphi 0, %s126
      %s141 = sphi 0, %s127
      %s145 = sphi 0, %s145
      %s147 = sphi 0, %s145
      %s148 = sphi 0, %s147
      %s162 = sphi 0, %s148
      %s168 = sphi 0, %s170
      %s171 = sphi 0, %s168
      %s172 = sphi 0, %s171
      %s188 = sphi 0, %s172
      %s194 = sphi 0, %s196
      %s197 = sphi 0, %s194
      %s198 = sphi 0, %s197
      %s214 = sphi 0, %s198
    $region4: #{tpu_custom_call.1} parent=1 // loop_header_branch
      %25 = sbr.rel (%p23) target = $region8
    $region5: #{tpu_custom_call.1} parent=1 // loop_body
      %s27 = ssub.s32 %s22, 1
      %s28 = ssub.s32 %s22, 2
      %s29 = sadd.s32 %s22, 1
      %s30 = ssub.s32 %s22, %s29
      %p31 = scmp.eq.s32.totalorder %s30, 0
      %s33 = sadd.s32 %s32, 1
      %s34 = scalar_select %p31, %s32, %s33
      %p37 = pneg %p31
      %p38 = scmp.eq.s32.totalorder %s22, 1
      %p39 = por %p37, %p38
      %p40 = scmp.ne.s32.totalorder %s32, %s35
      %p41 = scmp.eq.s32.totalorder %s22, 0
      %p42 = por %p40, %p41
      %p43 = scmp.ne.s32.totalorder %s32, %s35
      %p44 = scmp.eq.s32.totalorder %s27, 1
      %p45 = por %p43, %p44
      %p46 = scmp.ne.s32.totalorder %s35, %s36
      %p47 = scmp.eq.s32.totalorder %s27, 0
      %p48 = por %p46, %p47
      %p49 = scmp.ne.s32.totalorder %s35, %s36
      %p50 = scmp.eq.s32.totalorder %s28, 1
      %p51 = por %p49, %p50
      %p53 = scmp.ne.s32.totalorder %s36, %s52
      %p54 = scmp.eq.s32.totalorder %s28, 0
      %p55 = por %p53, %p54
      %s56 = ssub.s32 %s22, %s29
      %p57 = scmp.eq.s32.totalorder %s56, 0
      %s59 = sadd.s32 %s58, 1
      %s60 = scalar_select %p57, %s58, %s59
      %p63 = pneg %p57
      %p64 = scmp.eq.s32.totalorder %s22, 1
      %p65 = por %p63, %p64
      %p66 = scmp.ne.s32.totalorder %s58, %s61
      %p67 = scmp.eq.s32.totalorder %s22, 0
      %p68 = por %p66, %p67
      %p69 = scmp.ne.s32.totalorder %s58, %s61
      %p70 = scmp.eq.s32.totalorder %s27, 1
      %p71 = por %p69, %p70
      %p72 = scmp.ne.s32.totalorder %s61, %s62
      %p73 = scmp.eq.s32.totalorder %s27, 0
      %p74 = por %p72, %p73
      %p75 = scmp.ne.s32.totalorder %s61, %s62
      %p76 = scmp.eq.s32.totalorder %s28, 1
      %p77 = por %p75, %p76
      %p79 = scmp.ne.s32.totalorder %s62, %s78
      %p80 = scmp.eq.s32.totalorder %s28, 0
      %p81 = por %p79, %p80
      %s83 = sadd.s32 %s82, 1
      %p86 = scmp.eq.s32.totalorder %s22, 1
      %p87 = scmp.ne.s32.totalorder %s82, %s84
      %p88 = scmp.eq.s32.totalorder %s22, 0
      %p89 = por %p87, %p88
      %p90 = scmp.ne.s32.totalorder %s82, %s84
      %p91 = scmp.eq.s32.totalorder %s27, 1
      %p92 = por %p90, %p91
      %p93 = scmp.ne.s32.totalorder %s84, %s85
      %p94 = scmp.eq.s32.totalorder %s27, 0
      %p95 = por %p93, %p94
      %p96 = scmp.ne.s32.totalorder %s84, %s85
      %p97 = scmp.eq.s32.totalorder %s28, 1
      %p98 = por %p96, %p97
      %p100 = scmp.ne.s32.totalorder %s85, %s99
      %p101 = scmp.eq.s32.totalorder %s28, 0
      %p102 = por %p100, %p101
      %s104 = sadd.s32 %s103, 1
      %p107 = scmp.eq.s32.totalorder %s22, 1
      %p108 = scmp.ne.s32.totalorder %s103, %s105
      %p109 = scmp.eq.s32.totalorder %s22, 0
      %p110 = por %p108, %p109
      %p111 = scmp.ne.s32.totalorder %s103, %s105
      %p112 = scmp.eq.s32.totalorder %s27, 1
      %p113 = por %p111, %p112
      %p114 = scmp.ne.s32.totalorder %s105, %s106
      %p115 = scmp.eq.s32.totalorder %s27, 0
      %p116 = por %p114, %p115
      %p117 = scmp.ne.s32.totalorder %s105, %s106
      %p118 = scmp.eq.s32.totalorder %s28, 1
      %p119 = por %p117, %p118
      %p121 = scmp.ne.s32.totalorder %s106, %s120
      %p122 = scmp.eq.s32.totalorder %s28, 0
      %p123 = por %p121, %p122
      %s125 = sadd.s32 %s124, 1
      %p128 = scmp.eq.s32.totalorder %s22, 1
      %p129 = scmp.ne.s32.totalorder %s124, %s126
      %p130 = scmp.eq.s32.totalorder %s22, 0
      %p131 = por %p129, %p130
      %p132 = scmp.ne.s32.totalorder %s124, %s126
      %p133 = scmp.eq.s32.totalorder %s27, 1
      %p134 = por %p132, %p133
      %p135 = scmp.ne.s32.totalorder %s126, %s127
      %p136 = scmp.eq.s32.totalorder %s27, 0
      %p137 = por %p135, %p136
      %p138 = scmp.ne.s32.totalorder %s126, %s127
      %p139 = scmp.eq.s32.totalorder %s28, 1
      %p140 = por %p138, %p139
      %p142 = scmp.ne.s32.totalorder %s127, %s141
      %p143 = scmp.eq.s32.totalorder %s28, 0
      %p144 = por %p142, %p143
      %s146 = sadd.s32 %s145, 1
      %p149 = scmp.eq.s32.totalorder %s22, 1
      %p150 = scmp.ne.s32.totalorder %s145, %s147
      %p151 = scmp.eq.s32.totalorder %s22, 0
      %p152 = por %p150, %p151
      %p153 = scmp.ne.s32.totalorder %s145, %s147
      %p154 = scmp.eq.s32.totalorder %s27, 1
      %p155 = por %p153, %p154
      %p156 = scmp.ne.s32.totalorder %s147, %s148
      %p157 = scmp.eq.s32.totalorder %s27, 0
      %p158 = por %p156, %p157
      %p159 = scmp.ne.s32.totalorder %s147, %s148
      %p160 = scmp.eq.s32.totalorder %s28, 1
      %p161 = por %p159, %p160
      %p163 = scmp.ne.s32.totalorder %s148, %s162
      %p164 = scmp.eq.s32.totalorder %s28, 0
      %p165 = por %p163, %p164
      %s166 = ssub.s32 %s22, %s29
      %p167 = scmp.eq.s32.totalorder %s166, 0
      %s169 = sadd.s32 %s168, 1
      %s170 = scalar_select %p167, %s168, %s169
      %p173 = pneg %p167
      %p174 = scmp.eq.s32.totalorder %s22, 1
      %p175 = por %p173, %p174
      %p176 = scmp.ne.s32.totalorder %s168, %s171
      %p177 = scmp.eq.s32.totalorder %s22, 0
      %p178 = por %p176, %p177
      %p179 = scmp.ne.s32.totalorder %s168, %s171
      %p180 = scmp.eq.s32.totalorder %s27, 1
      %p181 = por %p179, %p180
      %p182 = scmp.ne.s32.totalorder %s171, %s172
      %p183 = scmp.eq.s32.totalorder %s27, 0
      %p184 = por %p182, %p183
      %p185 = scmp.ne.s32.totalorder %s171, %s172
      %p186 = scmp.eq.s32.totalorder %s28, 1
      %p187 = por %p185, %p186
      %p189 = scmp.ne.s32.totalorder %s172, %s188
      %p190 = scmp.eq.s32.totalorder %s28, 0
      %p191 = por %p189, %p190
      %s192 = ssub.s32 %s22, %s29
      %p193 = scmp.eq.s32.totalorder %s192, 0
      %s195 = sadd.s32 %s194, 1
      %s196 = scalar_select %p193, %s194, %s195
      %p199 = pneg %p193
      %p200 = scmp.eq.s32.totalorder %s22, 1
      %p201 = por %p199, %p200
      %p202 = scmp.ne.s32.totalorder %s194, %s197
      %p203 = scmp.eq.s32.totalorder %s22, 0
      %p204 = por %p202, %p203
      %p205 = scmp.ne.s32.totalorder %s194, %s197
      %p206 = scmp.eq.s32.totalorder %s27, 1
      %p207 = por %p205, %p206
      %p208 = scmp.ne.s32.totalorder %s197, %s198
      %p209 = scmp.eq.s32.totalorder %s27, 0
      %p210 = por %p208, %p209
      %p211 = scmp.ne.s32.totalorder %s197, %s198
      %p212 = scmp.eq.s32.totalorder %s28, 1
      %p213 = por %p211, %p212
      %p215 = scmp.ne.s32.totalorder %s198, %s214
      %p216 = scmp.eq.s32.totalorder %s28, 0
      %p217 = por %p215, %p216
      %p218 = scmp.le.s32.totalorder 1, %s22
      %p219 = scmp.lt.s32.totalorder %s22, 3
      %p220 = pnand %p218, %p219
      %p221 = pneg %p220
      // Predicated region
      $region9: #{tpu_custom_call.1} parent=5 // pred_check
        _
      $region10: #{tpu_custom_call.1} parent=5 // pred_check_branch
        %223 = sbr.rel (%p220) target = $region12
      $region11: #{tpu_custom_call.1} parent=5 // pred_region
        %s224 = ssub.s32 %s22, 1
        // Predicated region
        $region13: #{tpu_custom_call.1} parent=11 // pred_check
          %p225 = pneg %p95
        $region14: #{tpu_custom_call.1} parent=11 // pred_check_branch
          %227 = sbr.rel (%p225) target = $region16
        $region15: #{tpu_custom_call.1} parent=11 // pred_region
          %s229 = ssub.s32 4096, 4096
          %230 = vsyncadd [#allocation3], %s229
          %s231 = sshll.u32 [#allocation2], 4
          %s232 = int_to_ptr.vmem [resolvable:$true] %s231
          %237 = dma.hbm_to_vmem [thread:$0]  %s2, 4096, %s232, [#allocation3], 256, 256, 16
        $region16: #{tpu_custom_call.1} parent=11 // pred_fallthru
          _
        // Predicated region
        $region17: #{tpu_custom_call.1} parent=11 // pred_check
          %p238 = pneg %p116
        $region18: #{tpu_custom_call.1} parent=11 // pred_check_branch
          %240 = sbr.rel (%p238) target = $region20
        $region19: #{tpu_custom_call.1} parent=11 // pred_region
          _
        $region20: #{tpu_custom_call.1} parent=11 // pred_fallthru
          _
        // Predicated region
        $region21: #{tpu_custom_call.1} parent=11 // pred_check
          %p241 = pneg %p137
        $region22: #{tpu_custom_call.1} parent=11 // pred_check_branch
          %243 = sbr.rel (%p241) target = $region24
        $region23: #{tpu_custom_call.1} parent=11 // pred_region
          _
        $region24: #{tpu_custom_call.1} parent=11 // pred_fallthru
          _
        // Predicated region
        $region25: #{tpu_custom_call.1} parent=11 // pred_check
          %p244 = pneg %p158
        $region26: #{tpu_custom_call.1} parent=11 // pred_check_branch
          %246 = sbr.rel (%p244) target = $region28
        $region27: #{tpu_custom_call.1} parent=11 // pred_region
          %s248 = ssub.s32 2048, 2048
          %249 = vsyncadd [#allocation6], %s248
          %s250 = sshll.u32 [#allocation5], 4
          %s251 = int_to_ptr.vmem [resolvable:$true] %s250
          %256 = dma.hbm_to_vmem [thread:$0]  %s5, 2048, %s251, [#allocation6], 128, 128, 8
        $region28: #{tpu_custom_call.1} parent=11 // pred_fallthru
          _
      $region12: #{tpu_custom_call.1} parent=5 // pred_fallthru
        _
      %p257 = scmp.lt.s32.totalorder %s22, 2
      // Predicated region
      $region29: #{tpu_custom_call.1} parent=5 // pred_check
        %p258 = pneg %p257
      $region30: #{tpu_custom_call.1} parent=5 // pred_check_branch
        %260 = sbr.rel (%p258) target = $region32
      $region31: #{tpu_custom_call.1} parent=5 // pred_region
        // Predicated region
        $region33: #{tpu_custom_call.1} parent=31 // pred_check
          %p261 = pneg %p42
        $region34: #{tpu_custom_call.1} parent=31 // pred_check_branch
          %263 = sbr.rel (%p261) target = $region36
        $region35: #{tpu_custom_call.1} parent=31 // pred_region
          %s264 = smul.u32 4, %s22
          %p265 = scmp.lt.s32.totalorder %s264, 7
          %s266 = scalar_select %p265, %s264, 7
          %s267 = smul.addr %s266, 8
          %s268 = scalar_lea.vmem %s0, %s267
          %s269 = smul.u32 4, %s22
        $region36: #{tpu_custom_call.1} parent=31 // pred_fallthru
          _
        // Predicated region
        $region37: #{tpu_custom_call.1} parent=31 // pred_check
          %p270 = pneg %p68
        $region38: #{tpu_custom_call.1} parent=31 // pred_check_branch
          %272 = sbr.rel (%p270) target = $region40
        $region39: #{tpu_custom_call.1} parent=31 // pred_region
          %s273 = smul.u32 4, %s22
          %p274 = scmp.lt.s32.totalorder %s273, 7
          %s275 = scalar_select %p274, %s273, 7
          %s276 = smul.addr %s275, 8
          %s277 = scalar_lea.vmem %s1, %s276
          %s278 = smul.u32 4, %s22
        $region40: #{tpu_custom_call.1} parent=31 // pred_fallthru
          _
      $region32: #{tpu_custom_call.1} parent=5 // pred_fallthru
        _
      %p279 = scmp.le.s32.totalorder 1, %s22
      %p280 = scmp.lt.s32.totalorder %s22, 3
      %p281 = pnand %p279, %p280
      %p282 = pneg %p281
      // Predicated region
      $region41: #{tpu_custom_call.1} parent=5 // pred_check
        _
      $region42: #{tpu_custom_call.1} parent=5 // pred_check_branch
        %284 = sbr.rel (%p281) target = $region44
      $region43: #{tpu_custom_call.1} parent=5 // pred_region
        %s285 = ssub.s32 %s22, 1
        // Predicated region
        $region45: #{tpu_custom_call.1} parent=43 // pred_check
          %p286 = pneg %p95
        $region46: #{tpu_custom_call.1} parent=43 // pred_check_branch
          %288 = sbr.rel (%p286) target = $region48
        $region47: #{tpu_custom_call.1} parent=43 // pred_region
          %289 = dma.done [#allocation3], 4096
        $region48: #{tpu_custom_call.1} parent=43 // pred_fallthru
          _
        // Predicated region
        $region49: #{tpu_custom_call.1} parent=43 // pred_check
          %p290 = pneg %p158
        $region50: #{tpu_custom_call.1} parent=43 // pred_check_branch
          %292 = sbr.rel (%p290) target = $region52
        $region51: #{tpu_custom_call.1} parent=43 // pred_region
          %293 = dma.done [#allocation6], 2048
        $region52: #{tpu_custom_call.1} parent=43 // pred_fallthru
          _
        %s294 = smul.u32 4, %s27
        %p295 = scmp.lt.s32.totalorder %s294, 7
        %s296 = scalar_select %p295, %s294, 7
        %s297 = smul.addr %s296, 8
        %s298 = scalar_lea.vmem %s0, %s297
        %p299 = pneg %p48
        %p300 = pneg %p45
        %s301 = smul.u32 4, %s27
        %p302 = scmp.lt.s32.totalorder %s301, 7
        %s303 = scalar_select %p302, %s301, 7
        %s304 = smul.addr %s303, 8
        %s305 = scalar_lea.vmem %s1, %s304
        %p306 = pneg %p74
        %p307 = pneg %p71
        %p308 = pneg %p95
        %p309 = pneg %p92
        %p310 = pneg %p116
        %p311 = pneg %p113
        %p312 = pneg %p137
        %p313 = pneg %p134
        %p314 = pneg %p158
        %p315 = pneg %p155
        %p316 = pneg %p184
        %p317 = pneg %p181
        %s318 = sand.u32 %s171, 1
        %s319 = scalar_lea.sflag [#allocation4], %s318
        %s320 = sand.u32 %s171, 1
        %s321 = smul.addr %s320, 32
        %s322 = scalar_lea.vmem [#allocation7], %s321
        %p323 = pneg %p210
        %p324 = pneg %p207
        %s325 = sand.u32 %s197, 1
        %s326 = scalar_lea.sflag [#allocation9], %s325
        %s327 = sand.u32 %s197, 1
        %s328 = smul.addr %s327, 32
        %s329 = scalar_lea.vmem [#allocation8], %s328
        %s330 = smul.u32 4, %s27
        %p331 = scmp.lt.s32.totalorder %s330, 7
        %s332 = scalar_select %p331, %s330, 7
        %s333 = smul.addr %s332, 8
        %s334 = scalar_lea.vmem %s0, %s333
        %s335 = smul.u32 4, %s27
        %s336 = smul.u32 4, %s27
        %p337 = scmp.lt.s32.totalorder %s336, 7
        %s338 = scalar_select %p337, %s336, 7
        %s339 = smul.addr %s338, 8
        %s340 = scalar_lea.vmem %s1, %s339
        %s341 = smul.u32 4, %s27
        %s342 = smul.u32 4, %s27
        %s343 = smul.u32 4, %s27
        %v344 = vld [vmem:[%s334] sm:$0xff]
        %v345 = vld [vmem:[%s334 + $0x8] sm:$0xff]
        %v346 = vld [vmem:[%s334 + $0x10] sm:$0xff]
        %v347 = vld [vmem:[%s334 + $0x18] sm:$0xff]
        %v348 = vld [vmem:[#allocation2] sm:$0xff]
        %v349 = vld [vmem:[#allocation2 + $0x8] sm:$0xff]
        %v350 = vld [vmem:[#allocation2 + $0x10] sm:$0xff]
        %v351 = vld [vmem:[#allocation2 + $0x18] sm:$0xff]
        %v352 = vld [vmem:[#allocation2 + $0x20] sm:$0xff]
        %v353 = vld [vmem:[#allocation2 + $0x28] sm:$0xff]
        %v354 = vld [vmem:[#allocation2 + $0x30] sm:$0xff]
        %v355 = vld [vmem:[#allocation2 + $0x38] sm:$0xff]
        %v356 = vld [vmem:[#allocation2 + $0x40] sm:$0xff]
        %v357 = vld [vmem:[#allocation2 + $0x48] sm:$0xff]
        %v358 = vld [vmem:[#allocation2 + $0x50] sm:$0xff]
        %v359 = vld [vmem:[#allocation2 + $0x58] sm:$0xff]
        %v360 = vld [vmem:[#allocation2 + $0x60] sm:$0xff]
        %v361 = vld [vmem:[#allocation2 + $0x68] sm:$0xff]
        %v362 = vld [vmem:[#allocation2 + $0x70] sm:$0xff]
        %v363 = vld [vmem:[#allocation2 + $0x78] sm:$0xff]
        %v364 = vld [vmem:[#allocation2 + $0x80] sm:$0xff]
        %v365 = vld [vmem:[#allocation2 + $0x88] sm:$0xff]
        %v366 = vld [vmem:[#allocation2 + $0x90] sm:$0xff]
        %v367 = vld [vmem:[#allocation2 + $0x98] sm:$0xff]
        %v368 = vld [vmem:[#allocation2 + $0xa0] sm:$0xff]
        %v369 = vld [vmem:[#allocation2 + $0xa8] sm:$0xff]
        %v370 = vld [vmem:[#allocation2 + $0xb0] sm:$0xff]
        %v371 = vld [vmem:[#allocation2 + $0xb8] sm:$0xff]
        %v372 = vld [vmem:[#allocation2 + $0xc0] sm:$0xff]
        %v373 = vld [vmem:[#allocation2 + $0xc8] sm:$0xff]
        %v374 = vld [vmem:[#allocation2 + $0xd0] sm:$0xff]
        %v375 = vld [vmem:[#allocation2 + $0xd8] sm:$0xff]
        %v376 = vld [vmem:[#allocation2 + $0xe0] sm:$0xff]
        %v377 = vld [vmem:[#allocation2 + $0xe8] sm:$0xff]
        %v378 = vld [vmem:[#allocation2 + $0xf0] sm:$0xff]
        %v379 = vld [vmem:[#allocation2 + $0xf8] sm:$0xff]
        %v380 = vld [vmem:[%s3] sm:$0x3]
        %v382 = vlaneseq
        %v383 = vshrl.u32 %v382, 7
        %v384 = vsub.s32 0, %v383
        %v385 = vrot.slane %v380, %v384
        %v386 = vlaneseq
        %v387 = vshrl.u32 %v386, 7
        %v388 = vsub.s32 1, %v387
        %v389 = vrot.slane %v380, %v388
        %392 = vmatprep.subr.mxu0 %v349
        %393 = vmatpush1.msra.mxu0 %v348
        %394 = vmatprep.subr.mxu0 %v351
        %395 = vmatpush1.msra.mxu0 %v350
        %396 = vmatprep.subr.mxu0 %v353
        %397 = vmatpush1.msra.mxu0 %v352
        %398 = vmatprep.subr.mxu0 %v355
        %399 = vmatpush1.msra.mxu0 %v354
        %400 = vmatprep.subr.mxu0 %v357
        %401 = vmatpush1.msra.mxu0 %v356
        %402 = vmatprep.subr.mxu0 %v359
        %403 = vmatpush1.msra.mxu0 %v358
        %404 = vmatprep.subr.mxu0 %v361
        %405 = vmatpush1.msra.mxu0 %v360
        %406 = vmatprep.subr.mxu0 %v363
        %407 = vmatpush1.msra.mxu0 %v362
        %408 = vmatprep.subr.mxu0 %v365
        %409 = vmatpush1.msra.mxu0 %v364
        %410 = vmatprep.subr.mxu0 %v367
        %411 = vmatpush1.msra.mxu0 %v366
        %412 = vmatprep.subr.mxu0 %v369
        %413 = vmatpush1.msra.mxu0 %v368
        %414 = vmatprep.subr.mxu0 %v371
        %415 = vmatpush1.msra.mxu0 %v370
        %416 = vmatprep.subr.mxu0 %v373
        %417 = vmatpush1.msra.mxu0 %v372
        %418 = vmatprep.subr.mxu0 %v375
        %419 = vmatpush1.msra.mxu0 %v374
        %420 = vmatprep.subr.mxu0 %v377
        %421 = vmatpush1.msra.mxu0 %v376
        %422 = vmatprep.subr.mxu0 %v379
        %423 = vmatpush1.msra.mxu0 %v378
        %424 = vmatprep.subr.mxu0 0.0
        %425 = vmatpush1.msra.mxu0 0.0
        %426 = vmatprep.subr.mxu0 0.0
        %427 = vmatpush1.msra.mxu0 0.0
        %428 = vmatprep.subr.mxu0 0.0
        %429 = vmatpush1.msra.mxu0 0.0
        %430 = vmatprep.subr.mxu0 0.0
        %431 = vmatpush1.msra.mxu0 0.0
        %432 = vmatprep.subr.mxu0 0.0
        %433 = vmatpush1.msra.mxu0 0.0
        %434 = vmatprep.subr.mxu0 0.0
        %435 = vmatpush1.msra.mxu0 0.0
        %436 = vmatprep.subr.mxu0 0.0
        %437 = vmatpush1.msra.mxu0 0.0
        %438 = vmatprep.subr.mxu0 0.0
        %439 = vmatpush1.msra.mxu0 0.0
        %440 = vmatprep.subr.mxu0 0.0
        %441 = vmatpush1.msra.mxu0 0.0
        %442 = vmatprep.subr.mxu0 0.0
        %443 = vmatpush1.msra.mxu0 0.0
        %444 = vmatprep.subr.mxu0 0.0
        %445 = vmatpush1.msra.mxu0 0.0
        %446 = vmatprep.subr.mxu0 0.0
        %447 = vmatpush1.msra.mxu0 0.0
        %448 = vmatprep.subr.mxu0 0.0
        %449 = vmatpush1.msra.mxu0 0.0
        %450 = vmatprep.subr.mxu0 0.0
        %451 = vmatpush1.msra.mxu0 0.0
        %452 = vmatprep.subr.mxu0 0.0
        %453 = vmatpush1.msra.mxu0 0.0
        %454 = vmatprep.subr.mxu0 0.0
        %455 = vmatpush1.msra.mxu0 0.0
        %456 = vmatprep.mubr.f32.mxu0 0.0
        %457 = vmatmul.mubr.f32.gmra.mrb[0].mxu0 %v344
        %v458 = vpop.f32.mrb[0].mxu0
        %v459 = vadd.f32 %v385, %v458
        %v460 = vpop.f32.mrb[0].mxu0
        %v461 = vadd.f32 %v389, %v460
        %462 = vmatprep.mubr.f32.mxu0 0.0
        %463 = vmatmul.mubr.f32.gmra.mrb[0].mxu0 %v345
        %v464 = vpop.f32.mrb[0].mxu0
        %v465 = vadd.f32 %v385, %v464
        %v466 = vpop.f32.mrb[0].mxu0
        %v467 = vadd.f32 %v389, %v466
        %468 = vmatprep.mubr.f32.mxu0 0.0
        %469 = vmatmul.mubr.f32.gmra.mrb[0].mxu0 %v346
        %v470 = vpop.f32.mrb[0].mxu0
        %v471 = vadd.f32 %v385, %v470
        %v472 = vpop.f32.mrb[0].mxu0
        %v473 = vadd.f32 %v389, %v472
        %474 = vmatprep.mubr.f32.mxu0 0.0
        %475 = vmatmul.mubr.f32.gmra.mrb[0].mxu0 %v347
        %v476 = vpop.f32.mrb[0].mxu0
        %v477 = vadd.f32 %v385, %v476
        %v478 = vpop.f32.mrb[0].mxu0
        %v479 = vadd.f32 %v389, %v478
        %480 = vdwg.mxu0
        %v481 = vxor.u32 %v459, 2147483648
        %v482 = vxor.u32 %v461, 2147483648
        %v483 = vxor.u32 %v465, 2147483648
        %v484 = vxor.u32 %v467, 2147483648
        %v485 = vxor.u32 %v471, 2147483648
        %v486 = vxor.u32 %v473, 2147483648
        %v487 = vxor.u32 %v477, 2147483648
        %v488 = vxor.u32 %v479, 2147483648
        %v489 = vmul.f32 %v481, 1.442695
        %v490 = vpow.pop %v489
        %v491 = vmul.f32 %v482, 1.442695
        %v492 = vpow.pop %v491
        %v493 = vmul.f32 %v483, 1.442695
        %v494 = vpow.pop %v493
        %v495 = vmul.f32 %v484, 1.442695
        %v496 = vpow.pop %v495
        %v497 = vmul.f32 %v485, 1.442695
        %v498 = vpow.pop %v497
        %v499 = vmul.f32 %v486, 1.442695
        %v500 = vpow.pop %v499
        %v501 = vmul.f32 %v487, 1.442695
        %v502 = vpow.pop %v501
        %v503 = vmul.f32 %v488, 1.442695
        %v504 = vpow.pop %v503
        %v505 = vadd.f32 %v490, 1.0
        %v506 = vadd.f32 %v492, 1.0
        %v507 = vadd.f32 %v494, 1.0
        %v508 = vadd.f32 %v496, 1.0
        %v509 = vadd.f32 %v498, 1.0
        %v510 = vadd.f32 %v500, 1.0
        %v511 = vadd.f32 %v502, 1.0
        %v512 = vadd.f32 %v504, 1.0
        %v513 = vrcp.pop %v505
        %v514 = vmul.f32 1.0, %v513
        %v515 = vrcp.pop %v506
        %v516 = vmul.f32 1.0, %v515
        %v517 = vrcp.pop %v507
        %v518 = vmul.f32 1.0, %v517
        %v519 = vrcp.pop %v508
        %v520 = vmul.f32 1.0, %v519
        %v521 = vrcp.pop %v509
        %v522 = vmul.f32 1.0, %v521
        %v523 = vrcp.pop %v510
        %v524 = vmul.f32 1.0, %v523
        %v525 = vrcp.pop %v511
        %v526 = vmul.f32 1.0, %v525
        %v527 = vrcp.pop %v512
        %v528 = vmul.f32 1.0, %v527
        %v529 = vmul.f32 %v459, %v514
        %v530 = vmul.f32 %v461, %v516
        %v531 = vmul.f32 %v465, %v518
        %v532 = vmul.f32 %v467, %v520
        %v533 = vmul.f32 %v471, %v522
        %v534 = vmul.f32 %v473, %v524
        %v535 = vmul.f32 %v477, %v526
        %v536 = vmul.f32 %v479, %v528
        %v537 = vld [vmem:[%s340] sm:$0xff]
        %v538 = vld [vmem:[%s340 + $0x8] sm:$0xff]
        %v539 = vld [vmem:[%s340 + $0x10] sm:$0xff]
        %v540 = vld [vmem:[%s340 + $0x18] sm:$0xff]
        %v541 = vld [vmem:[%s4] sm:$0xff]
        %vm542 = vcmask 64512
        %v544 = vsel %vm542, %v537, 0
        %v547 = vsel %vm542, %v538, 0
        %v550 = vsel %vm542, %v539, 0
        %v553 = vsel %vm542, %v540, 0
        %555 = vmatprep.subr.mxu0 0.0
        %556 = vmatpush1.msra.mxu0 %v541
        %557 = vmatprep.subr.mxu0 0.0
        %558 = vmatpush1.msra.mxu0 0.0
        %559 = vmatprep.subr.mxu0 0.0
        %560 = vmatpush1.msra.mxu0 0.0
        %561 = vmatprep.subr.mxu0 0.0
        %562 = vmatpush1.msra.mxu0 0.0
        %563 = vmatprep.subr.mxu0 0.0
        %564 = vmatpush1.msra.mxu0 0.0
        %565 = vmatprep.subr.mxu0 0.0
        %566 = vmatpush1.msra.mxu0 0.0
        %567 = vmatprep.subr.mxu0 0.0
        %568 = vmatpush1.msra.mxu0 0.0
        %569 = vmatprep.subr.mxu0 0.0
        %570 = vmatpush1.msra.mxu0 0.0
        %571 = vmatprep.subr.mxu0 0.0
        %572 = vmatpush1.msra.mxu0 0.0
        %573 = vmatprep.subr.mxu0 0.0
        %574 = vmatpush1.msra.mxu0 0.0
        %575 = vmatprep.subr.mxu0 0.0
        %576 = vmatpush1.msra.mxu0 0.0
        %577 = vmatprep.subr.mxu0 0.0
        %578 = vmatpush1.msra.mxu0 0.0
        %579 = vmatprep.subr.mxu0 0.0
        %580 = vmatpush1.msra.mxu0 0.0
        %581 = vmatprep.subr.mxu0 0.0
        %582 = vmatpush1.msra.mxu0 0.0
        %583 = vmatprep.subr.mxu0 0.0
        %584 = vmatpush1.msra.mxu0 0.0
        %585 = vmatprep.subr.mxu0 0.0
        %586 = vmatpush1.msra.mxu0 0.0
        %587 = vmatprep.subr.mxu0 0.0
        %588 = vmatpush1.msra.mxu0 0.0
        %589 = vmatprep.subr.mxu0 0.0
        %590 = vmatpush1.msra.mxu0 0.0
        %591 = vmatprep.subr.mxu0 0.0
        %592 = vmatpush1.msra.mxu0 0.0
        %593 = vmatprep.subr.mxu0 0.0
        %594 = vmatpush1.msra.mxu0 0.0
        %595 = vmatprep.subr.mxu0 0.0
        %596 = vmatpush1.msra.mxu0 0.0
        %597 = vmatprep.subr.mxu0 0.0
        %598 = vmatpush1.msra.mxu0 0.0
        %599 = vmatprep.subr.mxu0 0.0
        %600 = vmatpush1.msra.mxu0 0.0
        %601 = vmatprep.subr.mxu0 0.0
        %602 = vmatpush1.msra.mxu0 0.0
        %603 = vmatprep.subr.mxu0 0.0
        %604 = vmatpush1.msra.mxu0 0.0
        %605 = vmatprep.subr.mxu0 0.0
        %606 = vmatpush1.msra.mxu0 0.0
        %607 = vmatprep.subr.mxu0 0.0
        %608 = vmatpush1.msra.mxu0 0.0
        %609 = vmatprep.subr.mxu0 0.0
        %610 = vmatpush1.msra.mxu0 0.0
        %611 = vmatprep.subr.mxu0 0.0
        %612 = vmatpush1.msra.mxu0 0.0
        %613 = vmatprep.subr.mxu0 0.0
        %614 = vmatpush1.msra.mxu0 0.0
        %615 = vmatprep.subr.mxu0 0.0
        %616 = vmatpush1.msra.mxu0 0.0
        %617 = vmatprep.subr.mxu0 0.0
        %618 = vmatpush1.msra.mxu0 0.0
        %619 = vmatprep.mubr.f32.mxu0 0.0
        %620 = vmatmul.mubr.f32.gmra.mrb[0].mxu0 %v544
        %v621 = vpop.f32.mrb[0].mxu0
        %v622 = vadd.f32 0.0, %v621
        %v623 = vpop.f32.mrb[0].mxu0
        %624 = vmatprep.mubr.f32.mxu0 0.0
        %625 = vmatmul.mubr.f32.gmra.mrb[0].mxu0 %v547
        %v626 = vpop.f32.mrb[0].mxu0
        %v627 = vadd.f32 0.0, %v626
        %v628 = vpop.f32.mrb[0].mxu0
        %629 = vmatprep.mubr.f32.mxu0 0.0
        %630 = vmatmul.mubr.f32.gmra.mrb[0].mxu0 %v550
        %v631 = vpop.f32.mrb[0].mxu0
        %v632 = vadd.f32 0.0, %v631
        %v633 = vpop.f32.mrb[0].mxu0
        %634 = vmatprep.mubr.f32.mxu0 0.0
        %635 = vmatmul.mubr.f32.gmra.mrb[0].mxu0 %v553
        %v636 = vpop.f32.mrb[0].mxu0
        %v637 = vadd.f32 0.0, %v636
        %v638 = vpop.f32.mrb[0].mxu0
        %639 = vdwg.mxu0
        %v640 = vmul.f32 %v530, %v622
        %v641 = vmul.f32 %v532, %v627
        %v642 = vmul.f32 %v534, %v632
        %v643 = vmul.f32 %v536, %v637
        %v644 = vld [vmem:[#allocation5] sm:$0xff]
        %v645 = vld [vmem:[#allocation5 + $0x8] sm:$0xff]
        %v646 = vld [vmem:[#allocation5 + $0x10] sm:$0xff]
        %v647 = vld [vmem:[#allocation5 + $0x18] sm:$0xff]
        %v648 = vld [vmem:[#allocation5 + $0x20] sm:$0xff]
        %v649 = vld [vmem:[#allocation5 + $0x28] sm:$0xff]
        %v650 = vld [vmem:[#allocation5 + $0x30] sm:$0xff]
        %v651 = vld [vmem:[#allocation5 + $0x38] sm:$0xff]
        %v652 = vld [vmem:[#allocation5 + $0x40] sm:$0xff]
        %v653 = vld [vmem:[#allocation5 + $0x48] sm:$0xff]
        %v654 = vld [vmem:[#allocation5 + $0x50] sm:$0xff]
        %v655 = vld [vmem:[#allocation5 + $0x58] sm:$0xff]
        %v656 = vld [vmem:[#allocation5 + $0x60] sm:$0xff]
        %v657 = vld [vmem:[#allocation5 + $0x68] sm:$0xff]
        %v658 = vld [vmem:[#allocation5 + $0x70] sm:$0xff]
        %v659 = vld [vmem:[#allocation5 + $0x78] sm:$0xff]
        %660 = vmatprep.subr.mxu0 0.0
        %661 = vmatpush1.msra.mxu0 %v644
        %662 = vmatprep.subr.mxu0 0.0
        %663 = vmatpush1.msra.mxu0 %v645
        %664 = vmatprep.subr.mxu0 0.0
        %665 = vmatpush1.msra.mxu0 %v646
        %666 = vmatprep.subr.mxu0 0.0
        %667 = vmatpush1.msra.mxu0 %v647
        %668 = vmatprep.subr.mxu0 0.0
        %669 = vmatpush1.msra.mxu0 %v648
        %670 = vmatprep.subr.mxu0 0.0
        %671 = vmatpush1.msra.mxu0 %v649
        %672 = vmatprep.subr.mxu0 0.0
        %673 = vmatpush1.msra.mxu0 %v650
        %674 = vmatprep.subr.mxu0 0.0
        %675 = vmatpush1.msra.mxu0 %v651
        %676 = vmatprep.subr.mxu0 0.0
        %677 = vmatpush1.msra.mxu0 %v652
        %678 = vmatprep.subr.mxu0 0.0
        %679 = vmatpush1.msra.mxu0 %v653
        %680 = vmatprep.subr.mxu0 0.0
        %681 = vmatpush1.msra.mxu0 %v654
        %682 = vmatprep.subr.mxu0 0.0
        %683 = vmatpush1.msra.mxu0 %v655
        %684 = vmatprep.subr.mxu0 0.0
        %685 = vmatpush1.msra.mxu0 %v656
        %686 = vmatprep.subr.mxu0 0.0
        %687 = vmatpush1.msra.mxu0 %v657
        %688 = vmatprep.subr.mxu0 0.0
        %689 = vmatpush1.msra.mxu0 %v658
        %690 = vmatprep.subr.mxu0 0.0
        %691 = vmatpush1.msra.mxu0 %v659
        %692 = vmatprep.subr.mxu0 0.0
        %693 = vmatpush1.msra.mxu0 0.0
        %694 = vmatprep.subr.mxu0 0.0
        %695 = vmatpush1.msra.mxu0 0.0
        %696 = vmatprep.subr.mxu0 0.0
        %697 = vmatpush1.msra.mxu0 0.0
        %698 = vmatprep.subr.mxu0 0.0
        %699 = vmatpush1.msra.mxu0 0.0
        %700 = vmatprep.subr.mxu0 0.0
        %701 = vmatpush1.msra.mxu0 0.0
        %702 = vmatprep.subr.mxu0 0.0
        %703 = vmatpush1.msra.mxu0 0.0
        %704 = vmatprep.subr.mxu0 0.0
        %705 = vmatpush1.msra.mxu0 0.0
        %706 = vmatprep.subr.mxu0 0.0
        %707 = vmatpush1.msra.mxu0 0.0
        %708 = vmatprep.subr.mxu0 0.0
        %709 = vmatpush1.msra.mxu0 0.0
        %710 = vmatprep.subr.mxu0 0.0
        %711 = vmatpush1.msra.mxu0 0.0
        %712 = vmatprep.subr.mxu0 0.0
        %713 = vmatpush1.msra.mxu0 0.0
        %714 = vmatprep.subr.mxu0 0.0
        %715 = vmatpush1.msra.mxu0 0.0
        %716 = vmatprep.subr.mxu0 0.0
        %717 = vmatpush1.msra.mxu0 0.0
        %718 = vmatprep.subr.mxu0 0.0
        %719 = vmatpush1.msra.mxu0 0.0
        %720 = vmatprep.subr.mxu0 0.0
        %721 = vmatpush1.msra.mxu0 0.0
        %722 = vmatprep.subr.mxu0 0.0
        %723 = vmatpush1.msra.mxu0 0.0
        %724 = vmatprep.mubr.f32.mxu0 0.0
        %725 = vmatmul.mubr.f32.gmra.mrb[0].mxu0 %v640
        %v726 = vpop.f32.mrb[0].mxu0
        %v727 = vadd.f32 0.0, %v726
        %v728 = vpop.f32.mrb[0].mxu0
        %729 = vmatprep.mubr.f32.mxu0 0.0
        %730 = vmatmul.mubr.f32.gmra.mrb[0].mxu0 %v641
        %v731 = vpop.f32.mrb[0].mxu0
        %v732 = vadd.f32 0.0, %v731
        %v733 = vpop.f32.mrb[0].mxu0
        %734 = vmatprep.mubr.f32.mxu0 0.0
        %735 = vmatmul.mubr.f32.gmra.mrb[0].mxu0 %v642
        %v736 = vpop.f32.mrb[0].mxu0
        %v737 = vadd.f32 0.0, %v736
        %v738 = vpop.f32.mrb[0].mxu0
        %739 = vmatprep.mubr.f32.mxu0 0.0
        %740 = vmatmul.mubr.f32.gmra.mrb[0].mxu0 %v643
        %v741 = vpop.f32.mrb[0].mxu0
        %v742 = vadd.f32 0.0, %v741
        %v743 = vpop.f32.mrb[0].mxu0
        %744 = vdwg.mxu0
        %v745 = vxor.u32 %v727, 2147483648
        %v746 = vxor.u32 %v732, 2147483648
        %v747 = vxor.u32 %v737, 2147483648
        %v748 = vxor.u32 %v742, 2147483648
        %v749 = vmul.f32 %v745, 1.442695
        %v750 = vpow.pop %v749
        %v751 = vmul.f32 %v746, 1.442695
        %v752 = vpow.pop %v751
        %v753 = vmul.f32 %v747, 1.442695
        %v754 = vpow.pop %v753
        %v755 = vmul.f32 %v748, 1.442695
        %v756 = vpow.pop %v755
        %v757 = vadd.f32 %v750, 1.0
        %v758 = vadd.f32 %v752, 1.0
        %v759 = vadd.f32 %v754, 1.0
        %v760 = vadd.f32 %v756, 1.0
        %v761 = vrcp.pop %v757
        %v762 = vmul.f32 1.0, %v761
        %v763 = vrcp.pop %v758
        %v764 = vmul.f32 1.0, %v763
        %v765 = vrcp.pop %v759
        %v766 = vmul.f32 1.0, %v765
        %v767 = vrcp.pop %v760
        %v768 = vmul.f32 1.0, %v767
        %v769 = vmul.f32 %v727, %v762
        %v770 = vmul.f32 %v732, %v764
        %v771 = vmul.f32 %v737, %v766
        %v772 = vmul.f32 %v742, %v768
        %773 = vst [vmem:[%s329] sm:$0xff] %v769
        %774 = vst [vmem:[%s329 + $0x8] sm:$0xff] %v770
        %775 = vst [vmem:[%s329 + $0x10] sm:$0xff] %v771
        %776 = vst [vmem:[%s329 + $0x18] sm:$0xff] %v772
        %777 = vst [vmem:[%s322] sm:$0xff] %v529
        %778 = vst [vmem:[%s322 + $0x8] sm:$0xff] %v531
        %779 = vst [vmem:[%s322 + $0x10] sm:$0xff] %v533
        %780 = vst [vmem:[%s322 + $0x18] sm:$0xff] %v535
        %s781 = sand.u32 %s171, 1
        %s782 = scalar_lea.sflag [#allocation4], %s781
        %s783 = sand.u32 %s171, 1
        %s784 = smul.addr %s783, 32
        %s785 = scalar_lea.vmem [#allocation7], %s784
        %s786 = sand.u32 %s197, 1
        %s787 = scalar_lea.sflag [#allocation9], %s786
        %s788 = sand.u32 %s197, 1
        %s789 = smul.addr %s788, 32
        %s790 = scalar_lea.vmem [#allocation8], %s789
        // Predicated region
        $region53: #{tpu_custom_call.1} parent=43 // pred_check
          %p791 = pneg %p181
        $region54: #{tpu_custom_call.1} parent=43 // pred_check_branch
          %793 = sbr.rel (%p791) target = $region56
        $region55: #{tpu_custom_call.1} parent=43 // pred_region
          %s794 = smul.u32 4, %s27
          %s796 = ssub.s32 512, 512
          %797 = vsyncadd %s782, %s796
          %s798 = smul.addr %s794, 128
          %s799 = scalar_lea.hbm %s6, %s798
          %s800 = sshll.u32 %s785, 4
          %s801 = int_to_ptr.vmem [resolvable:$true] %s800
          %806 = dma.vmem_to_hbm [thread:$0]  %s801, 512, %s799, %s782, 128, 128, 8
        $region56: #{tpu_custom_call.1} parent=43 // pred_fallthru
          _
        // Predicated region
        $region57: #{tpu_custom_call.1} parent=43 // pred_check
          %p807 = pneg %p207
        $region58: #{tpu_custom_call.1} parent=43 // pred_check_branch
          %809 = sbr.rel (%p807) target = $region60
        $region59: #{tpu_custom_call.1} parent=43 // pred_region
          %s810 = smul.u32 4, %s27
          %s812 = ssub.s32 512, 512
          %813 = vsyncadd %s787, %s812
          %s814 = smul.addr %s810, 128
          %s815 = scalar_lea.hbm %s7, %s814
          %s816 = sshll.u32 %s790, 4
          %s817 = int_to_ptr.vmem [resolvable:$true] %s816
          %822 = dma.vmem_to_hbm [thread:$0]  %s817, 512, %s815, %s787, 128, 128, 8
        $region60: #{tpu_custom_call.1} parent=43 // pred_fallthru
          _
      $region44: #{tpu_custom_call.1} parent=5 // pred_fallthru
        _
      %p823 = scmp.le.s32.totalorder 2, %s22
      // Predicated region
      $region61: #{tpu_custom_call.1} parent=5 // pred_check
        %p824 = pneg %p823
      $region62: #{tpu_custom_call.1} parent=5 // pred_check_branch
        %826 = sbr.rel (%p824) target = $region64
      $region63: #{tpu_custom_call.1} parent=5 // pred_region
        %s827 = ssub.s32 %s22, 2
        // Predicated region
        $region65: #{tpu_custom_call.1} parent=63 // pred_check
          %p828 = pneg %p187
        $region66: #{tpu_custom_call.1} parent=63 // pred_check_branch
          %830 = sbr.rel (%p828) target = $region68
        $region67: #{tpu_custom_call.1} parent=63 // pred_region
          %s831 = sand.u32 %s172, 1
          %s832 = scalar_lea.sflag [#allocation4], %s831
          %s833 = sand.u32 %s172, 1
          %s834 = smul.addr %s833, 32
          %s835 = scalar_lea.vmem [#allocation7], %s834
          %836 = dma.done %s832, 512
        $region68: #{tpu_custom_call.1} parent=63 // pred_fallthru
          _
        // Predicated region
        $region69: #{tpu_custom_call.1} parent=63 // pred_check
          %p837 = pneg %p213
        $region70: #{tpu_custom_call.1} parent=63 // pred_check_branch
          %839 = sbr.rel (%p837) target = $region72
        $region71: #{tpu_custom_call.1} parent=63 // pred_region
          %s840 = sand.u32 %s198, 1
          %s841 = scalar_lea.sflag [#allocation9], %s840
          %s842 = sand.u32 %s198, 1
          %s843 = smul.addr %s842, 32
          %s844 = scalar_lea.vmem [#allocation8], %s843
          %845 = dma.done %s841, 512
        $region72: #{tpu_custom_call.1} parent=63 // pred_fallthru
          _
      $region64: #{tpu_custom_call.1} parent=5 // pred_fallthru
        _
    $region6: #{tpu_custom_call.1} parent=1 // loop_footer
      %s26 = sadd.s32 1, %s22
    $region7: #{tpu_custom_call.1} parent=1 // loop_footer_branch
      %21 = sbr.rel target = $region3
    $region8: #{tpu_custom_call.1} parent=1 // loop_exit
      _
    %846 = vsyncpa [#allocation3], 1
    %s847 = scalar_lea.sflag [#allocation3], 1
    %848 = vsyncpa %s847, 1
    %849 = vsyncpa [#allocation6], 1
    %850 = vsyncpa [#allocation4], 1
    %s851 = scalar_lea.sflag [#allocation4], 1
    %852 = vsyncpa %s851, 1
    %853 = vsyncpa [#allocation9], 1
    %s854 = scalar_lea.sflag [#allocation9], 1
    %855 = vsyncpa %s854, 1

</llo_original>
